<compile_context>
chip_gen: v6e
topology: v6e:2x2x1
jax: 0.10.0
libtpu: 0.0.40
codegen_flags: <defaults>
</compile_context>

<pallas_src>
import functools

import jax
import jax.numpy as jnp
from jax import lax
from jax.experimental import pallas as pl
from jax.experimental.pallas import tpu as pltpu

# --- small, module-consistent hyperparameters (module uses d_model=256, n_head=12) ---
BATCH = 2
SEQ = 8                          # T  (<= block_size in the PyTorch module)
D_MODEL = 32                     # C
N_HEAD = 4
HEAD_SIZE = D_MODEL // N_HEAD    # 8

# MXU-operand dtype. bf16 is the native MXU dtype on v5e/v6e/v7x; accumulation is
# f32 (preferred_element_type) and all softmax/vector math stays f32.
MXU_DTYPE = jnp.bfloat16


def _mha_kernel(x_ref, wq_ref, bq_ref, wkv_t_ref, bkv_t_ref, wp_ref, bp_ref,
                mask_ref, o_ref, *, n_head, head_size):
    """Fused multi-head causal attention, all batch elements in one invocation."""
    hhs = n_head * head_size
    f32 = jnp.float32
    mxu_dtype = wq_ref.dtype

    x = x_ref[...].astype(mxu_dtype)                              # (B*T, C)

    # Q for all heads, row layout (B*T, H*hs); 1/sqrt(hs) already folded into
    # the weights/bias at fusion time.
    q_all = jnp.dot(x, wq_ref[...], preferred_element_type=f32) + bq_ref[...]

    # K,V for all heads in transposed, head-on-sublane layout (2*H*hs, B*T):
    # per-head slices below are 8-row sublane slices (no lane relayout), and the
    # score matmul becomes a plain NN matmul against k^T.
    kv_t = lax.dot_general(wkv_t_ref[...], x, (((1,), (1,)), ((), ())),
                           preferred_element_type=f32) + bkv_t_ref[...]

    bias = mask_ref[...]                  # additive 0 / -1e30 block-diag causal mask
    acc = jnp.zeros(o_ref.shape, f32)     # f32 accumulator for the output projection

    for h in range(n_head):               # static unroll over heads
        r = h * head_size
        q_h = q_all[:, r:r + head_size].astype(mxu_dtype)         # (B*T, hs)
        k_t = kv_t[r:r + head_size, :].astype(mxu_dtype)          # (hs, B*T)
        v_t = kv_t[hhs + r:hhs + r + head_size, :]                # (hs, B*T), f32

        # scores = (q * scale) @ k^T  -> NN MXU matmul, then one additive mask.
        s = jnp.dot(q_h, k_t, preferred_element_type=f32) + bias  # (B*T, B*T)

        # numerically stable softmax; all vector math f32, reciprocal on the EUP.
        m = jnp.max(s, axis=-1, keepdims=True)
        e = jnp.exp(s - m)
        p = e * pl.reciprocal(jnp.sum(e, axis=-1, keepdims=True), approx=True)

        # out_h = p @ v  (contract key axis of both; no materialized v transpose).
        out_h = lax.dot_general(p.astype(mxu_dtype), v_t.astype(mxu_dtype),
                                (((1,), (1,)), ((), ())),
                                preferred_element_type=f32)       # (B*T, hs)

        # Distributed output projection: sublane-aligned 8-row slice of wp,
        # no lane-wise concat of head outputs.
        acc = acc + jnp.dot(out_h.astype(mxu_dtype), wp_ref[r:r + head_size, :],
                            preferred_element_type=f32)

    o_ref[...] = (acc + bp_ref[...]).astype(o_ref.dtype)


def _make_mask_bias(batch, seq):
    """Additive block-diagonal causal mask over the flattened (batch*seq) axis."""
    idx = jnp.arange(batch * seq)
    row, col = idx[:, None], idx[None, :]
    allowed = (row // seq == col // seq) & (col <= row)
    return jnp.where(allowed, 0.0, -1e30).astype(jnp.float32)     # finite -> NaN-safe


def fuse_params(params, batch, seq, mxu_dtype=MXU_DTYPE):
    """One-time weight fusion (hoisted out of the per-call path)."""
    wq, bq = params["wq"], params["bq"]          # (H, C, hs), (H, 1, hs)
    wk, bk = params["wk"], params["bk"]
    wv, bv = params["wv"], params["bv"]
    wp, bp = params["wp"], params["bp"]          # (H, hs, C), (1, C)
    H, C, hs = wq.shape
    hhs = H * hs
    scale = 1.0 / (hs ** 0.5)

    # Q in row layout (C, H*hs), softmax scale folded into weights + bias.
    w_q = (jnp.transpose(wq, (1, 0, 2)).reshape(C, hhs) * scale).astype(mxu_dtype)
    b_q = (bq.reshape(1, hhs) * scale).astype(jnp.float32)

    # K,V fused in transposed head-on-sublane layout (2*H*hs, C).
    to_rows = lambda w: jnp.transpose(w, (0, 2, 1)).reshape(hhs, C)
    w_kv_t = jnp.concatenate([to_rows(wk), to_rows(wv)], axis=0).astype(mxu_dtype)
    b_kv_t = jnp.concatenate([bk.reshape(hhs, 1), bv.reshape(hhs, 1)],
                             axis=0).astype(jnp.float32)

    w_proj = wp.reshape(hhs, C).astype(mxu_dtype)                 # (H*hs, C)
    b_proj = bp.astype(jnp.float32)                               # (1, C)

    return dict(w_q=w_q, b_q=b_q, w_kv_t=w_kv_t, b_kv_t=b_kv_t,
                w_proj=w_proj, b_proj=b_proj,
                mask_bias=_make_mask_bias(batch, seq),
                n_head=H, head_size=hs)


def multi_masked(x, fused):
    """x: (B, T, C) float32. fused: output of fuse_params (precomputed once)."""
    B, T, C = x.shape
    x2d = x.reshape(B * T, C)        # lane-dense 2-D slab; batch folded into the kernel

    kernel = functools.partial(_mha_kernel, n_head=fused["n_head"],
                               head_size=fused["head_size"])
    vmem = lambda: pl.BlockSpec(memory_space=pltpu.MemorySpace.VMEM)

    # No grid: single invocation, every operand single-buffered whole in VMEM.
    out2d = pl.pallas_call(
        kernel,
        out_shape=jax.ShapeDtypeStruct((B * T, C), x.dtype),
        in_specs=[vmem() for _ in range(8)],
        out_specs=vmem(),
    )(x2d, fused["w_q"], fused["b_q"], fused["w_kv_t"], fused["b_kv_t"],
      fused["w_proj"], fused["b_proj"], fused["mask_bias"])

    return out2d.reshape(B, T, C)


def init_params(key, d_model, n_head):
    hs = d_model // n_head
    keys = jax.random.split(key, 9)
    lin = lambda k, shape, fan_in: jax.random.uniform(
        k, shape, jnp.float32, -1.0 / (fan_in ** 0.5), 1.0 / (fan_in ** 0.5))
    return {
        "wq": lin(keys[0], (n_head, d_model, hs), d_model),
        "bq": lin(keys[1], (n_head, 1, hs), d_model),
        "wk": lin(keys[2], (n_head, d_model, hs), d_model),
        "bk": lin(keys[3], (n_head, 1, hs), d_model),
        "wv": lin(keys[4], (n_head, d_model, hs), d_model),
        "bv": lin(keys[5], (n_head, 1, hs), d_model),
        "wp": lin(keys[6], (n_head, hs, d_model), n_head * hs),
        "bp": lin(keys[7], (1, d_model), n_head * hs),
    }


def _reference(x, p):
    """Plain-JAX f32 reference of the PyTorch forward (dropout = identity)."""
    B, T, C = x.shape
    H, _, hs = p["wq"].shape
    outs = []
    for h in range(H):
        q = x @ p["wq"][h] + p["bq"][h]
        k = x @ p["wk"][h] + p["bk"][h]
        v = x @ p["wv"][h] + p["bv"][h]
        wei = (q @ jnp.swapaxes(k, -1, -2)) * (hs ** -0.5)
        mask = jnp.tril(jnp.ones((T, T), bool))
        wei = jnp.where(mask, wei, -jnp.inf)
        wei = jax.nn.softmax(wei, axis=-1)
        outs.append(wei @ v)
    cat = jnp.concatenate(outs, axis=-1)
    return cat @ p["wp"].reshape(H * hs, C) + p["bp"][0]


if __name__ == "__main__":
    key = jax.random.PRNGKey(0)
    kx, kp = jax.random.split(key)
    x = jax.random.normal(kx, (BATCH, SEQ, D_MODEL), jnp.float32)
    params = init_params(kp, D_MODEL, N_HEAD)

    # One-time fusion (scale folding, transposed K/V layout, flat wp, mask bias).
    fused = fuse_params(params, BATCH, SEQ)

    out = multi_masked(x, fused)
    out = jax.block_until_ready(out)

    ref = _reference(x, params)
    assert out.shape == (BATCH, SEQ, D_MODEL)
    # Tolerance accounts for bf16 MXU operands + approximate (EUP) reciprocal
    # vs. the all-f32 reference.
    assert jnp.allclose(out, ref, atol=3e-2, rtol=3e-2), \
        float(jnp.max(jnp.abs(out - ref)))
    print("KERNEL_OK")
</pallas_src>

<mosaic_0001>
module attributes {stable_mosaic.version = 11 : i64} {
  func.func @_mha_kernel(%arg0: memref<16x32xf32, #tpu.memory_space<vmem>>, %arg1: memref<32x32xbf16, #tpu.memory_space<vmem>>, %arg2: memref<1x32xf32, #tpu.memory_space<vmem>>, %arg3: memref<64x32xbf16, #tpu.memory_space<vmem>>, %arg4: memref<64x1xf32, #tpu.memory_space<vmem>>, %arg5: memref<32x32xbf16, #tpu.memory_space<vmem>>, %arg6: memref<1x32xf32, #tpu.memory_space<vmem>>, %arg7: memref<16x16xf32, #tpu.memory_space<vmem>>, %arg8: memref<16x32xf32, #tpu.memory_space<vmem>>) attributes {dimension_semantics = [], scalar_prefetch = 0 : i64, scratch_operands = 0 : i64, tpu.core_type = #tpu.core_type<tc>} {
    %c0 = arith.constant 0 : index
    %c0_0 = arith.constant 0 : index
    %0 = vector.load %arg0[%c0, %c0_0] : memref<16x32xf32, #tpu.memory_space<vmem>>, vector<16x32xf32>
    %1 = arith.truncf %0 : vector<16x32xf32> to vector<16x32xbf16>
    %c0_1 = arith.constant 0 : index
    %c0_2 = arith.constant 0 : index
    %2 = vector.load %arg1[%c0_1, %c0_2] : memref<32x32xbf16, #tpu.memory_space<vmem>>, vector<32x32xbf16>
    %cst = arith.constant dense<0.000000e+00> : vector<16x32xf32>
    %3 = tpu.matmul %1, %2, %cst {dimension_numbers = #tpu.dot_dimension_numbers<[1], [0], [0], [1], [0, 0, 1, 1], [], []>} : vector<16x32xbf16>, vector<32x32xbf16>, vector<16x32xf32> -> vector<16x32xf32>
    %c0_3 = arith.constant 0 : index
    %c0_4 = arith.constant 0 : index
    %4 = vector.load %arg2[%c0_3, %c0_4] : memref<1x32xf32, #tpu.memory_space<vmem>>, vector<1x32xf32>
    %5 = vector.broadcast %4 : vector<1x32xf32> to vector<16x32xf32>
    %6 = arith.addf %3, %5 : vector<16x32xf32>
    %c0_5 = arith.constant 0 : index
    %c0_6 = arith.constant 0 : index
    %7 = vector.load %arg3[%c0_5, %c0_6] : memref<64x32xbf16, #tpu.memory_space<vmem>>, vector<64x32xbf16>
    %cst_7 = arith.constant dense<0.000000e+00> : vector<64x16xf32>
    %8 = tpu.matmul %7, %1, %cst_7 {dimension_numbers = #tpu.dot_dimension_numbers<[1], [1], [0], [0], [0, 0, 1, 0], [], []>} : vector<64x32xbf16>, vector<16x32xbf16>, vector<64x16xf32> -> vector<64x16xf32>
    %c0_8 = arith.constant 0 : index
    %c0_9 = arith.constant 0 : index
    %9 = vector.load %arg4[%c0_8, %c0_9] : memref<64x1xf32, #tpu.memory_space<vmem>>, vector<64x1xf32>
    %10 = vector.broadcast %9 : vector<64x1xf32> to vector<64x16xf32>
    %11 = arith.addf %8, %10 : vector<64x16xf32>
    %c0_10 = arith.constant 0 : index
    %c0_11 = arith.constant 0 : index
    %12 = vector.load %arg7[%c0_10, %c0_11] : memref<16x16xf32, #tpu.memory_space<vmem>>, vector<16x16xf32>
    %cst_12 = arith.constant 0.000000e+00 : f32
    %13 = vector.broadcast %cst_12 : f32 to vector<16x32xf32>
    %14 = vector.extract_strided_slice %6 {offsets = [0, 0], sizes = [16, 8], strides = [1, 1]} : vector<16x32xf32> to vector<16x8xf32>
    %15 = arith.truncf %14 : vector<16x8xf32> to vector<16x8xbf16>
    %16 = vector.extract_strided_slice %11 {offsets = [0, 0], sizes = [8, 16], strides = [1, 1]} : vector<64x16xf32> to vector<8x16xf32>
    %17 = arith.truncf %16 : vector<8x16xf32> to vector<8x16xbf16>
    %18 = vector.extract_strided_slice %11 {offsets = [32, 0], sizes = [8, 16], strides = [1, 1]} : vector<64x16xf32> to vector<8x16xf32>
    %cst_13 = arith.constant dense<0.000000e+00> : vector<16x16xf32>
    %19 = tpu.matmul %15, %17, %cst_13 {dimension_numbers = #tpu.dot_dimension_numbers<[1], [0], [0], [1], [0, 0, 1, 1], [], []>} : vector<16x8xbf16>, vector<8x16xbf16>, vector<16x16xf32> -> vector<16x16xf32>
    %20 = arith.addf %19, %12 : vector<16x16xf32>
    %cst_14 = arith.constant dense<0xFF800000> : vector<16xf32>
    %21 = vector.multi_reduction <maximumf>, %20, %cst_14 [1] : vector<16x16xf32> to vector<16xf32>
    %22 = vector.shape_cast %21 : vector<16xf32> to vector<16x1xf32>
    %23 = vector.broadcast %22 : vector<16x1xf32> to vector<16x16xf32>
    %24 = arith.subf %20, %23 : vector<16x16xf32>
    %25 = math.exp %24 : vector<16x16xf32>
    %cst_15 = arith.constant dense<0.000000e+00> : vector<16xf32>
    %26 = vector.multi_reduction <add>, %25, %cst_15 [1] : vector<16x16xf32> to vector<16xf32>
    %27 = vector.shape_cast %26 : vector<16xf32> to vector<16x1xf32>
    %28 = tpu.reciprocal %27 {approx = true} : vector<16x1xf32> -> vector<16x1xf32>
    %29 = vector.broadcast %28 : vector<16x1xf32> to vector<16x16xf32>
    %30 = arith.mulf %25, %29 : vector<16x16xf32>
    %31 = arith.truncf %30 : vector<16x16xf32> to vector<16x16xbf16>
    %32 = arith.truncf %18 : vector<8x16xf32> to vector<8x16xbf16>
    %cst_16 = arith.constant dense<0.000000e+00> : vector<16x8xf32>
    %33 = tpu.matmul %31, %32, %cst_16 {dimension_numbers = #tpu.dot_dimension_numbers<[1], [1], [0], [0], [0, 0, 1, 0], [], []>} : vector<16x16xbf16>, vector<8x16xbf16>, vector<16x8xf32> -> vector<16x8xf32>
    %34 = arith.truncf %33 : vector<16x8xf32> to vector<16x8xbf16>
    %c0_17 = arith.constant 0 : index
    %c0_18 = arith.constant 0 : index
    %35 = vector.load %arg5[%c0_17, %c0_18] : memref<32x32xbf16, #tpu.memory_space<vmem>>, vector<8x32xbf16>
    %cst_19 = arith.constant dense<0.000000e+00> : vector<16x32xf32>
    %36 = tpu.matmul %34, %35, %cst_19 {dimension_numbers = #tpu.dot_dimension_numbers<[1], [0], [0], [1], [0, 0, 1, 1], [], []>} : vector<16x8xbf16>, vector<8x32xbf16>, vector<16x32xf32> -> vector<16x32xf32>
    %37 = arith.addf %13, %36 : vector<16x32xf32>
    %38 = vector.extract_strided_slice %6 {offsets = [0, 8], sizes = [16, 8], strides = [1, 1]} : vector<16x32xf32> to vector<16x8xf32>
    %39 = arith.truncf %38 : vector<16x8xf32> to vector<16x8xbf16>
    %40 = vector.extract_strided_slice %11 {offsets = [8, 0], sizes = [8, 16], strides = [1, 1]} : vector<64x16xf32> to vector<8x16xf32>
    %41 = arith.truncf %40 : vector<8x16xf32> to vector<8x16xbf16>
    %42 = vector.extract_strided_slice %11 {offsets = [40, 0], sizes = [8, 16], strides = [1, 1]} : vector<64x16xf32> to vector<8x16xf32>
    %cst_20 = arith.constant dense<0.000000e+00> : vector<16x16xf32>
    %43 = tpu.matmul %39, %41, %cst_20 {dimension_numbers = #tpu.dot_dimension_numbers<[1], [0], [0], [1], [0, 0, 1, 1], [], []>} : vector<16x8xbf16>, vector<8x16xbf16>, vector<16x16xf32> -> vector<16x16xf32>
    %44 = arith.addf %43, %12 : vector<16x16xf32>
    %cst_21 = arith.constant dense<0xFF800000> : vector<16xf32>
    %45 = vector.multi_reduction <maximumf>, %44, %cst_21 [1] : vector<16x16xf32> to vector<16xf32>
    %46 = vector.shape_cast %45 : vector<16xf32> to vector<16x1xf32>
    %47 = vector.broadcast %46 : vector<16x1xf32> to vector<16x16xf32>
    %48 = arith.subf %44, %47 : vector<16x16xf32>
    %49 = math.exp %48 : vector<16x16xf32>
    %cst_22 = arith.constant dense<0.000000e+00> : vector<16xf32>
    %50 = vector.multi_reduction <add>, %49, %cst_22 [1] : vector<16x16xf32> to vector<16xf32>
    %51 = vector.shape_cast %50 : vector<16xf32> to vector<16x1xf32>
    %52 = tpu.reciprocal %51 {approx = true} : vector<16x1xf32> -> vector<16x1xf32>
    %53 = vector.broadcast %52 : vector<16x1xf32> to vector<16x16xf32>
    %54 = arith.mulf %49, %53 : vector<16x16xf32>
    %55 = arith.truncf %54 : vector<16x16xf32> to vector<16x16xbf16>
    %56 = arith.truncf %42 : vector<8x16xf32> to vector<8x16xbf16>
    %cst_23 = arith.constant dense<0.000000e+00> : vector<16x8xf32>
    %57 = tpu.matmul %55, %56, %cst_23 {dimension_numbers = #tpu.dot_dimension_numbers<[1], [1], [0], [0], [0, 0, 1, 0], [], []>} : vector<16x16xbf16>, vector<8x16xbf16>, vector<16x8xf32> -> vector<16x8xf32>
    %58 = arith.truncf %57 : vector<16x8xf32> to vector<16x8xbf16>
    %c8 = arith.constant 8 : index
    %c0_24 = arith.constant 0 : index
    %59 = vector.load %arg5[%c8, %c0_24] : memref<32x32xbf16, #tpu.memory_space<vmem>>, vector<8x32xbf16>
    %cst_25 = arith.constant dense<0.000000e+00> : vector<16x32xf32>
    %60 = tpu.matmul %58, %59, %cst_25 {dimension_numbers = #tpu.dot_dimension_numbers<[1], [0], [0], [1], [0, 0, 1, 1], [], []>} : vector<16x8xbf16>, vector<8x32xbf16>, vector<16x32xf32> -> vector<16x32xf32>
    %61 = arith.addf %37, %60 : vector<16x32xf32>
    %62 = vector.extract_strided_slice %6 {offsets = [0, 16], sizes = [16, 8], strides = [1, 1]} : vector<16x32xf32> to vector<16x8xf32>
    %63 = arith.truncf %62 : vector<16x8xf32> to vector<16x8xbf16>
    %64 = vector.extract_strided_slice %11 {offsets = [16, 0], sizes = [8, 16], strides = [1, 1]} : vector<64x16xf32> to vector<8x16xf32>
    %65 = arith.truncf %64 : vector<8x16xf32> to vector<8x16xbf16>
    %66 = vector.extract_strided_slice %11 {offsets = [48, 0], sizes = [8, 16], strides = [1, 1]} : vector<64x16xf32> to vector<8x16xf32>
    %cst_26 = arith.constant dense<0.000000e+00> : vector<16x16xf32>
    %67 = tpu.matmul %63, %65, %cst_26 {dimension_numbers = #tpu.dot_dimension_numbers<[1], [0], [0], [1], [0, 0, 1, 1], [], []>} : vector<16x8xbf16>, vector<8x16xbf16>, vector<16x16xf32> -> vector<16x16xf32>
    %68 = arith.addf %67, %12 : vector<16x16xf32>
    %cst_27 = arith.constant dense<0xFF800000> : vector<16xf32>
    %69 = vector.multi_reduction <maximumf>, %68, %cst_27 [1] : vector<16x16xf32> to vector<16xf32>
    %70 = vector.shape_cast %69 : vector<16xf32> to vector<16x1xf32>
    %71 = vector.broadcast %70 : vector<16x1xf32> to vector<16x16xf32>
    %72 = arith.subf %68, %71 : vector<16x16xf32>
    %73 = math.exp %72 : vector<16x16xf32>
    %cst_28 = arith.constant dense<0.000000e+00> : vector<16xf32>
    %74 = vector.multi_reduction <add>, %73, %cst_28 [1] : vector<16x16xf32> to vector<16xf32>
    %75 = vector.shape_cast %74 : vector<16xf32> to vector<16x1xf32>
    %76 = tpu.reciprocal %75 {approx = true} : vector<16x1xf32> -> vector<16x1xf32>
    %77 = vector.broadcast %76 : vector<16x1xf32> to vector<16x16xf32>
    %78 = arith.mulf %73, %77 : vector<16x16xf32>
    %79 = arith.truncf %78 : vector<16x16xf32> to vector<16x16xbf16>
    %80 = arith.truncf %66 : vector<8x16xf32> to vector<8x16xbf16>
    %cst_29 = arith.constant dense<0.000000e+00> : vector<16x8xf32>
    %81 = tpu.matmul %79, %80, %cst_29 {dimension_numbers = #tpu.dot_dimension_numbers<[1], [1], [0], [0], [0, 0, 1, 0], [], []>} : vector<16x16xbf16>, vector<8x16xbf16>, vector<16x8xf32> -> vector<16x8xf32>
    %82 = arith.truncf %81 : vector<16x8xf32> to vector<16x8xbf16>
    %c16 = arith.constant 16 : index
    %c0_30 = arith.constant 0 : index
    %83 = vector.load %arg5[%c16, %c0_30] : memref<32x32xbf16, #tpu.memory_space<vmem>>, vector<8x32xbf16>
    %cst_31 = arith.constant dense<0.000000e+00> : vector<16x32xf32>
    %84 = tpu.matmul %82, %83, %cst_31 {dimension_numbers = #tpu.dot_dimension_numbers<[1], [0], [0], [1], [0, 0, 1, 1], [], []>} : vector<16x8xbf16>, vector<8x32xbf16>, vector<16x32xf32> -> vector<16x32xf32>
    %85 = arith.addf %61, %84 : vector<16x32xf32>
    %86 = vector.extract_strided_slice %6 {offsets = [0, 24], sizes = [16, 8], strides = [1, 1]} : vector<16x32xf32> to vector<16x8xf32>
    %87 = arith.truncf %86 : vector<16x8xf32> to vector<16x8xbf16>
    %88 = vector.extract_strided_slice %11 {offsets = [24, 0], sizes = [8, 16], strides = [1, 1]} : vector<64x16xf32> to vector<8x16xf32>
    %89 = arith.truncf %88 : vector<8x16xf32> to vector<8x16xbf16>
    %90 = vector.extract_strided_slice %11 {offsets = [56, 0], sizes = [8, 16], strides = [1, 1]} : vector<64x16xf32> to vector<8x16xf32>
    %cst_32 = arith.constant dense<0.000000e+00> : vector<16x16xf32>
    %91 = tpu.matmul %87, %89, %cst_32 {dimension_numbers = #tpu.dot_dimension_numbers<[1], [0], [0], [1], [0, 0, 1, 1], [], []>} : vector<16x8xbf16>, vector<8x16xbf16>, vector<16x16xf32> -> vector<16x16xf32>
    %92 = arith.addf %91, %12 : vector<16x16xf32>
    %cst_33 = arith.constant dense<0xFF800000> : vector<16xf32>
    %93 = vector.multi_reduction <maximumf>, %92, %cst_33 [1] : vector<16x16xf32> to vector<16xf32>
    %94 = vector.shape_cast %93 : vector<16xf32> to vector<16x1xf32>
    %95 = vector.broadcast %94 : vector<16x1xf32> to vector<16x16xf32>
    %96 = arith.subf %92, %95 : vector<16x16xf32>
    %97 = math.exp %96 : vector<16x16xf32>
    %cst_34 = arith.constant dense<0.000000e+00> : vector<16xf32>
    %98 = vector.multi_reduction <add>, %97, %cst_34 [1] : vector<16x16xf32> to vector<16xf32>
    %99 = vector.shape_cast %98 : vector<16xf32> to vector<16x1xf32>
    %100 = tpu.reciprocal %99 {approx = true} : vector<16x1xf32> -> vector<16x1xf32>
    %101 = vector.broadcast %100 : vector<16x1xf32> to vector<16x16xf32>
    %102 = arith.mulf %97, %101 : vector<16x16xf32>
    %103 = arith.truncf %102 : vector<16x16xf32> to vector<16x16xbf16>
    %104 = arith.truncf %90 : vector<8x16xf32> to vector<8x16xbf16>
    %cst_35 = arith.constant dense<0.000000e+00> : vector<16x8xf32>
    %105 = tpu.matmul %103, %104, %cst_35 {dimension_numbers = #tpu.dot_dimension_numbers<[1], [1], [0], [0], [0, 0, 1, 0], [], []>} : vector<16x16xbf16>, vector<8x16xbf16>, vector<16x8xf32> -> vector<16x8xf32>
    %106 = arith.truncf %105 : vector<16x8xf32> to vector<16x8xbf16>
    %c24 = arith.constant 24 : index
    %c0_36 = arith.constant 0 : index
    %107 = vector.load %arg5[%c24, %c0_36] : memref<32x32xbf16, #tpu.memory_space<vmem>>, vector<8x32xbf16>
    %cst_37 = arith.constant dense<0.000000e+00> : vector<16x32xf32>
    %108 = tpu.matmul %106, %107, %cst_37 {dimension_numbers = #tpu.dot_dimension_numbers<[1], [0], [0], [1], [0, 0, 1, 1], [], []>} : vector<16x8xbf16>, vector<8x32xbf16>, vector<16x32xf32> -> vector<16x32xf32>
    %109 = arith.addf %85, %108 : vector<16x32xf32>
    %c0_38 = arith.constant 0 : index
    %c0_39 = arith.constant 0 : index
    %110 = vector.load %arg6[%c0_38, %c0_39] : memref<1x32xf32, #tpu.memory_space<vmem>>, vector<1x32xf32>
    %111 = vector.broadcast %110 : vector<1x32xf32> to vector<16x32xf32>
    %112 = arith.addf %109, %111 : vector<16x32xf32>
    %c0_40 = arith.constant 0 : index
    %c0_41 = arith.constant 0 : index
    %113 = vector.load %arg8[%c0_40, %c0_41] : memref<16x32xf32, #tpu.memory_space<vmem>>, vector<16x32xf32>
    tpu.vector_store %arg8[%c0_40, %c0_41], %112 {strides = array<i32>} : memref<16x32xf32, #tpu.memory_space<vmem>>, vector<16x32xf32>,
    return
  }
}

</mosaic_0001>

<llo_original>
// kernel: tpu_custom_call.1
$region0: #{tpu_custom_call.1}
  #allocation0 [shape = 'u32[]', space=smem, size = 0x4, offset = 0x4, fixed_abs, tag = 'smem constant byte address 0x4 - core index']
  #allocation1 [shape = 'u32[144,128]{1,0:T(1,128)}', space=vmem, size = 0x12000, scoped, tag = 'internal scratch']
  %s0 = inlined_call_operand.vmem [shape: f32[16,32], index: 0, kind: input, shape index: {}]
  %s1 = inlined_call_operand.vmem [shape: bf16[32,32], index: 1, kind: input, shape index: {}]
  %s2 = inlined_call_operand.vmem [shape: f32[1,32], index: 2, kind: input, shape index: {}]
  %s3 = inlined_call_operand.vmem [shape: bf16[64,32], index: 3, kind: input, shape index: {}]
  %s4 = inlined_call_operand.vmem [shape: f32[64,1], index: 4, kind: input, shape index: {}]
  %s5 = inlined_call_operand.vmem [shape: bf16[32,32], index: 5, kind: input, shape index: {}]
  %s6 = inlined_call_operand.vmem [shape: f32[1,32], index: 6, kind: input, shape index: {}]
  %s7 = inlined_call_operand.vmem [shape: f32[16,16], index: 7, kind: input, shape index: {}]
  %s8 = inlined_call_operand.hbm [shape: f32[16,32], index: 8, kind: output, shape index: {}]
  %s9 = sld [smem:[#allocation0]]
  $region42: #{tpu_custom_call.1} parent=0
    _
  %s11 = ssub.s32 1, %s9
  %s12 = scalar_select 0, %s11, %s9
  $region1: #{tpu_custom_call.1} parent=0
    #allocation2 [shape = 'u8[8192]{0}', space=vmem, size = 0x2000, scoped, tag = 'output window, operand 0, single buffered']
    #allocation3 [shape = 's32[1]{0}', space=sflag, size = 0x4, scoped, tag = 'scoped memory for tpu_custom_call.1']
    %13 = vsyncpa [#allocation3], 0
    // Predicated region
    $region2: #{tpu_custom_call.1} parent=1 // pred_check
      _
    $region3: #{tpu_custom_call.1} parent=1 // pred_check_branch
      %15 = sbr.rel (0) target = $region5
    $region4: #{tpu_custom_call.1} parent=1 // pred_region
      _
    $region5: #{tpu_custom_call.1} parent=1 // pred_fallthru
      _
    // Predicated region
    $region6: #{tpu_custom_call.1} parent=1 // pred_check
      _
    $region7: #{tpu_custom_call.1} parent=1 // pred_check_branch
      %17 = sbr.rel (0) target = $region9
    $region8: #{tpu_custom_call.1} parent=1 // pred_region
      _
    $region9: #{tpu_custom_call.1} parent=1 // pred_fallthru
      _
    // Predicated region
    $region10: #{tpu_custom_call.1} parent=1 // pred_check
      _
    $region11: #{tpu_custom_call.1} parent=1 // pred_check_branch
      %19 = sbr.rel (0) target = $region13
    $region12: #{tpu_custom_call.1} parent=1 // pred_region
      _
    $region13: #{tpu_custom_call.1} parent=1 // pred_fallthru
      _
    // Predicated region
    $region14: #{tpu_custom_call.1} parent=1 // pred_check
      _
    $region15: #{tpu_custom_call.1} parent=1 // pred_check_branch
      %21 = sbr.rel (0) target = $region17
    $region16: #{tpu_custom_call.1} parent=1 // pred_region
      _
    $region17: #{tpu_custom_call.1} parent=1 // pred_fallthru
      _
    // Predicated region
    $region18: #{tpu_custom_call.1} parent=1 // pred_check
      _
    $region19: #{tpu_custom_call.1} parent=1 // pred_check_branch
      %23 = sbr.rel (0) target = $region21
    $region20: #{tpu_custom_call.1} parent=1 // pred_region
      _
    $region21: #{tpu_custom_call.1} parent=1 // pred_fallthru
      _
    // Predicated region
    $region22: #{tpu_custom_call.1} parent=1 // pred_check
      _
    $region23: #{tpu_custom_call.1} parent=1 // pred_check_branch
      %25 = sbr.rel (0) target = $region25
    $region24: #{tpu_custom_call.1} parent=1 // pred_region
      _
    $region25: #{tpu_custom_call.1} parent=1 // pred_fallthru
      _
    // Predicated region
    $region26: #{tpu_custom_call.1} parent=1 // pred_check
      _
    $region27: #{tpu_custom_call.1} parent=1 // pred_check_branch
      %27 = sbr.rel (0) target = $region29
    $region28: #{tpu_custom_call.1} parent=1 // pred_region
      _
    $region29: #{tpu_custom_call.1} parent=1 // pred_fallthru
      _
    // Predicated region
    $region30: #{tpu_custom_call.1} parent=1 // pred_check
      _
    $region31: #{tpu_custom_call.1} parent=1 // pred_check_branch
      %29 = sbr.rel (0) target = $region33
    $region32: #{tpu_custom_call.1} parent=1 // pred_region
      _
    $region33: #{tpu_custom_call.1} parent=1 // pred_fallthru
      _
    %v31 = vld [vmem:[%s0] sm:$0xff]
    %v32 = vld [vmem:[%s0 + $0x8] sm:$0xff]
    %v33 = vpack.c.bf16 %v32, %v31
    %v34 = vld [vmem:[%s1] sm:$0xf]
    %v35 = vld [vmem:[%s1 + $0x4] sm:$0xf]
    %v36 = vld [vmem:[%s1 + $0x8] sm:$0xf]
    %v37 = vld [vmem:[%s1 + $0xc] sm:$0xf]
    %v38 = vld [vmem:[%s2] sm:$0x1]
    %v40 = vlaneseq
    %v41 = vshrl.u32 %v40, 7
    %v42 = vsub.s32 0, %v41
    %v43 = vrot.slane %v38, %v42
    %v49 = vunpack.c.l.b16 %v34
    %v50 = vunpack.c.l.b16 %v35
    %v51 = vunpack.c.l.b16 %v36
    %v52 = vunpack.c.l.b16 %v37
    %v53 = vpack.c.b16 %v50, %v49
    %v54 = vpack.c.b16 %v52, %v51
    %vm57 = vcmask 261120
    %v59 = vsel %vm57, %v33, 0
    %61 = vmatprep.subr.bf16.mxu0 0
    %62 = vmatpush1.bf16.msra.mxu0 0
    %63 = vmatprep.subr.bf16.mxu0 0
    %64 = vmatpush1.bf16.msra.mxu0 0
    %65 = vmatprep.subr.bf16.mxu0 0
    %66 = vmatpush1.bf16.msra.mxu0 0
    %67 = vmatprep.subr.bf16.mxu0 0
    %68 = vmatpush1.bf16.msra.mxu0 0
    %69 = vmatprep.subr.bf16.mxu0 0
    %70 = vmatpush1.bf16.msra.mxu0 0
    %71 = vmatprep.subr.bf16.mxu0 0
    %72 = vmatpush1.bf16.msra.mxu0 0
    %73 = vmatprep.subr.bf16.mxu0 0
    %74 = vmatpush1.bf16.msra.mxu0 %v54
    %75 = vmatprep.subr.bf16.mxu0 0
    %76 = vmatpush1.bf16.msra.mxu0 %v53
    %77 = vmatprep.subr.bf16.mxu0 0
    %78 = vmatpush2.bf16.msra.mxu0 0
    %79 = vmatprep.subr.bf16.mxu0 0
    %80 = vmatpush2.bf16.msra.mxu0 0
    %81 = vmatprep.subr.bf16.mxu0 0
    %82 = vmatpush2.bf16.msra.mxu0 0
    %83 = vmatprep.subr.bf16.mxu0 0
    %84 = vmatpush2.bf16.msra.mxu0 0
    %85 = vmatprep.subr.bf16.mxu0 0
    %86 = vmatpush2.bf16.msra.mxu0 0
    %87 = vmatprep.subr.bf16.mxu0 0
    %88 = vmatpush2.bf16.msra.mxu0 0
    %89 = vmatprep.subr.bf16.mxu0 0
    %90 = vmatpush2.bf16.msra.mxu0 0
    %91 = vmatprep.subr.bf16.mxu0 0
    %92 = vmatpush2.bf16.msra.mxu0 0
    %93 = vmatprep.mubr.bf16.mxu0 0
    %94 = vmatmul.mubr.bf16.gmra.mxu0 %v59
    %v95 = vpop.f32.mrf.mxu0
    %v96 = vadd.f32 %v43, %v95
    %v97 = vpop.f32.mrf.mxu0
    %v98 = vpop.f32.mrf.mxu0
    %v99 = vadd.f32 %v43, %v98
    %v100 = vpop.f32.mrf.mxu0
    %101 = vdwg.mxu0
    %v102 = vld [vmem:[%s3] sm:$0xf]
    %v103 = vld [vmem:[%s3 + $0x4] sm:$0xf]
    %v104 = vld [vmem:[%s3 + $0x8] sm:$0xf]
    %v105 = vld [vmem:[%s3 + $0xc] sm:$0xf]
    %v106 = vld [vmem:[%s3 + $0x10] sm:$0xf]
    %v107 = vld [vmem:[%s3 + $0x14] sm:$0xf]
    %v108 = vld [vmem:[%s3 + $0x18] sm:$0xf]
    %v109 = vld [vmem:[%s3 + $0x1c] sm:$0xf]
    %v110 = vld [vmem:[%s4] sm:$0xff]
    %v111 = vld [vmem:[%s4 + $0x8] sm:$0xff]
    %v112 = vld [vmem:[%s4 + $0x10] sm:$0xff]
    %v113 = vld [vmem:[%s4 + $0x18] sm:$0xff]
    %v114 = vld [vmem:[%s4 + $0x20] sm:$0xff]
    %v115 = vld [vmem:[%s4 + $0x28] sm:$0xff]
    %v116 = vld [vmem:[%s4 + $0x30] sm:$0xff]
    %v117 = vld [vmem:[%s4 + $0x38] sm:$0xff]
    %119 = vset.pattern.permute.xlu0 0
    %120 = vperm.xlu0 %119, %v110
    %v121 = vpop.permute.xlu0 %120
    %124 = vset.pattern.permute.xlu0 0
    %125 = vperm.xlu0 %124, %v111
    %v126 = vpop.permute.xlu0 %125
    %129 = vset.pattern.permute.xlu0 0
    %130 = vperm.xlu0 %129, %v112
    %v131 = vpop.permute.xlu0 %130
    %134 = vset.pattern.permute.xlu0 0
    %135 = vperm.xlu0 %134, %v113
    %v136 = vpop.permute.xlu0 %135
    %139 = vset.pattern.permute.xlu0 0
    %140 = vperm.xlu0 %139, %v114
    %v141 = vpop.permute.xlu0 %140
    %144 = vset.pattern.permute.xlu0 0
    %145 = vperm.xlu0 %144, %v115
    %v146 = vpop.permute.xlu0 %145
    %149 = vset.pattern.permute.xlu0 0
    %150 = vperm.xlu0 %149, %v116
    %v151 = vpop.permute.xlu0 %150
    %154 = vset.pattern.permute.xlu0 0
    %155 = vperm.xlu0 %154, %v117
    %v156 = vpop.permute.xlu0 %155
    %v166 = vunpack.c.l.b16 %v102
    %v167 = vunpack.c.l.b16 %v103
    %v168 = vunpack.c.l.b16 %v104
    %v169 = vunpack.c.l.b16 %v105
    %v170 = vunpack.c.l.b16 %v106
    %v171 = vunpack.c.l.b16 %v107
    %v172 = vunpack.c.l.b16 %v108
    %v173 = vunpack.c.l.b16 %v109
    %v174 = vpack.c.b16 %v167, %v166
    %v175 = vpack.c.b16 %v169, %v168
    %v176 = vpack.c.b16 %v171, %v170
    %v177 = vpack.c.b16 %v173, %v172
    %v179 = vsel %vm57, %v174, 0
    %v182 = vsel %vm57, %v175, 0
    %v185 = vsel %vm57, %v176, 0
    %v188 = vsel %vm57, %v177, 0
    %190 = vmatprep.subr.bf16.mxu0 0
    %191 = vmatpush1.bf16.xpose.msra.mxu0 0
    %192 = vmatprep.subr.bf16.mxu0 0
    %193 = vmatpush1.bf16.xpose.msra.mxu0 0
    %194 = vmatprep.subr.bf16.mxu0 0
    %195 = vmatpush1.bf16.xpose.msra.mxu0 0
    %196 = vmatprep.subr.bf16.mxu0 0
    %197 = vmatpush1.bf16.xpose.msra.mxu0 0
    %198 = vmatprep.subr.bf16.mxu0 0
    %199 = vmatpush1.bf16.xpose.msra.mxu0 0
    %200 = vmatprep.subr.bf16.mxu0 0
    %201 = vmatpush1.bf16.xpose.msra.mxu0 0
    %202 = vmatprep.subr.bf16.mxu0 0
    %203 = vmatpush1.bf16.xpose.msra.mxu0 0
    %204 = vmatprep.subr.bf16.mxu0 0
    %205 = vmatpush1.bf16.xpose.msra.mxu0 %v59
    %206 = vmatprep.subr.bf16.mxu0 0
    %207 = vmatpush2.bf16.xpose.msra.mxu0 0
    %208 = vmatprep.subr.bf16.mxu0 0
    %209 = vmatpush2.bf16.xpose.msra.mxu0 0
    %210 = vmatprep.subr.bf16.mxu0 0
    %211 = vmatpush2.bf16.xpose.msra.mxu0 0
    %212 = vmatprep.subr.bf16.mxu0 0
    %213 = vmatpush2.bf16.xpose.msra.mxu0 0
    %214 = vmatprep.subr.bf16.mxu0 0
    %215 = vmatpush2.bf16.xpose.msra.mxu0 0
    %216 = vmatprep.subr.bf16.mxu0 0
    %217 = vmatpush2.bf16.xpose.msra.mxu0 0
    %218 = vmatprep.subr.bf16.mxu0 0
    %219 = vmatpush2.bf16.xpose.msra.mxu0 0
    %220 = vmatprep.subr.bf16.mxu0 0
    %221 = vmatpush2.bf16.xpose.msra.mxu0 0
    %222 = vmatprep.mubr.bf16.mxu0 0
    %223 = vmatmul.mubr.bf16.gmra.mxu0 %v179
    %v224 = vpop.f32.mrf.mxu0
    %v225 = vadd.f32 %v121, %v224
    %v226 = vpop.f32.mrf.mxu0
    %v227 = vpop.f32.mrf.mxu0
    %v228 = vadd.f32 %v126, %v227
    %v229 = vpop.f32.mrf.mxu0
    %230 = vmatprep.mubr.bf16.mxu0 0
    %231 = vmatmul.mubr.bf16.gmra.mxu0 %v182
    %v232 = vpop.f32.mrf.mxu0
    %v233 = vadd.f32 %v131, %v232
    %v234 = vpop.f32.mrf.mxu0
    %v235 = vpop.f32.mrf.mxu0
    %v236 = vadd.f32 %v136, %v235
    %v237 = vpop.f32.mrf.mxu0
    %238 = vmatprep.mubr.bf16.mxu0 0
    %239 = vmatmul.mubr.bf16.gmra.mxu0 %v185
    %v240 = vpop.f32.mrf.mxu0
    %v241 = vadd.f32 %v141, %v240
    %v242 = vpop.f32.mrf.mxu0
    %v243 = vpop.f32.mrf.mxu0
    %v244 = vadd.f32 %v146, %v243
    %v245 = vpop.f32.mrf.mxu0
    %246 = vmatprep.mubr.bf16.mxu0 0
    %247 = vmatmul.mubr.bf16.gmra.mxu0 %v188
    %v248 = vpop.f32.mrf.mxu0
    %v249 = vadd.f32 %v151, %v248
    %v250 = vpop.f32.mrf.mxu0
    %v251 = vpop.f32.mrf.mxu0
    %v252 = vadd.f32 %v156, %v251
    %v253 = vpop.f32.mrf.mxu0
    %254 = vdwg.mxu0
    %v255 = vld [vmem:[%s7] sm:$0xff]
    %v256 = vld [vmem:[%s7 + $0x8] sm:$0xff]
    %v257 = vpack.c.bf16 %v99, %v96
    %v258 = vpack.c.bf16 %v225, %v225
    %vm259 = vcmask 64512
    %v261 = vsel %vm259, %v257, 0
    %vm263 = vcmask 1043456
    %v265 = vsel %vm263, %v258, 0
    %267 = vmatprep.subr.bf16.mxu0 0
    %268 = vmatpush1.bf16.msra.mxu0 0
    %269 = vmatprep.subr.bf16.mxu0 0
    %270 = vmatpush1.bf16.msra.mxu0 0
    %271 = vmatprep.subr.bf16.mxu0 0
    %272 = vmatpush1.bf16.msra.mxu0 0
    %273 = vmatprep.subr.bf16.mxu0 0
    %274 = vmatpush1.bf16.msra.mxu0 0
    %275 = vmatprep.subr.bf16.mxu0 0
    %276 = vmatpush1.bf16.msra.mxu0 0
    %277 = vmatprep.subr.bf16.mxu0 0
    %278 = vmatpush1.bf16.msra.mxu0 0
    %279 = vmatprep.subr.bf16.mxu0 0
    %280 = vmatpush1.bf16.msra.mxu0 0
    %281 = vmatprep.subr.bf16.mxu0 0
    %282 = vmatpush1.bf16.msra.mxu0 %v265
    %283 = vmatprep.subr.bf16.mxu0 0
    %284 = vmatpush2.bf16.msra.mxu0 0
    %285 = vmatprep.subr.bf16.mxu0 0
    %286 = vmatpush2.bf16.msra.mxu0 0
    %287 = vmatprep.subr.bf16.mxu0 0
    %288 = vmatpush2.bf16.msra.mxu0 0
    %289 = vmatprep.subr.bf16.mxu0 0
    %290 = vmatpush2.bf16.msra.mxu0 0
    %291 = vmatprep.subr.bf16.mxu0 0
    %292 = vmatpush2.bf16.msra.mxu0 0
    %293 = vmatprep.subr.bf16.mxu0 0
    %294 = vmatpush2.bf16.msra.mxu0 0
    %295 = vmatprep.subr.bf16.mxu0 0
    %296 = vmatpush2.bf16.msra.mxu0 0
    %297 = vmatprep.subr.bf16.mxu0 0
    %298 = vmatpush2.bf16.msra.mxu0 0
    %299 = vmatprep.mubr.bf16.mxu0 0
    %300 = vmatmul.mubr.bf16.gmra.mxu0 %v261
    %v301 = vpop.f32.mrf.mxu0
    %v302 = vadd.f32 %v255, %v301
    %v303 = vpop.f32.mrf.mxu0
    %v304 = vpop.f32.mrf.mxu0
    %v305 = vadd.f32 %v256, %v304
    %v306 = vpop.f32.mrf.mxu0
    %307 = vdwg.mxu0
    %vm308 = vcmask 130048
    %v309 = vsel %vm308, %v302, -inf
    %310 = vmax.xlane.f32.xlu0 %v309
    %v311 = vpop.xlane.xlu0 %310
    %v312 = vsel %vm308, %v305, -inf
    %313 = vmax.xlane.f32.xlu0 %v312
    %v314 = vpop.xlane.xlu0 %313
    %v315 = vsub.f32 %v302, %v311
    %v316 = vsub.f32 %v305, %v314
    %v317 = vmul.f32 %v315, 1.442695
    %v318 = vpow.pop %v317
    %v319 = vmul.f32 %v316, 1.442695
    %v320 = vpow.pop %v319
    %v321 = vsel %vm308, %v318, 0.0
    %322 = vadd.xlane.f32.xlu0 %v321
    %v323 = vpop.xlane.xlu0 %322
    %v324 = vsel %vm308, %v320, 0.0
    %325 = vadd.xlane.f32.xlu0 %v324
    %v326 = vpop.xlane.xlu0 %325
    %v327 = vrcp.pop %v323
    %v328 = vrcp.pop %v326
    %v329 = vmul.f32 %v318, %v327
    %v330 = vmul.f32 %v320, %v328
    %v331 = vpack.c.bf16 %v330, %v329
    %v332 = vpack.c.bf16 %v241, %v241
    %v334 = vsel %vm308, %v331, 0
    %v337 = vsel %vm308, %v332, 0
    %339 = vmatprep.subr.bf16.mxu0 0
    %340 = vmatpush1.bf16.xpose.msra.mxu0 0
    %341 = vmatprep.subr.bf16.mxu0 0
    %342 = vmatpush1.bf16.xpose.msra.mxu0 0
    %343 = vmatprep.subr.bf16.mxu0 0
    %344 = vmatpush1.bf16.xpose.msra.mxu0 0
    %345 = vmatprep.subr.bf16.mxu0 0
    %346 = vmatpush1.bf16.xpose.msra.mxu0 0
    %347 = vmatprep.subr.bf16.mxu0 0
    %348 = vmatpush1.bf16.xpose.msra.mxu0 0
    %349 = vmatprep.subr.bf16.mxu0 0
    %350 = vmatpush1.bf16.xpose.msra.mxu0 0
    %351 = vmatprep.subr.bf16.mxu0 0
    %352 = vmatpush1.bf16.xpose.msra.mxu0 0
    %353 = vmatprep.subr.bf16.mxu0 0
    %354 = vmatpush1.bf16.xpose.msra.mxu0 %v337
    %355 = vmatprep.subr.bf16.mxu0 0
    %356 = vmatpush2.bf16.xpose.msra.mxu0 0
    %357 = vmatprep.subr.bf16.mxu0 0
    %358 = vmatpush2.bf16.xpose.msra.mxu0 0
    %359 = vmatprep.subr.bf16.mxu0 0
    %360 = vmatpush2.bf16.xpose.msra.mxu0 0
    %361 = vmatprep.subr.bf16.mxu0 0
    %362 = vmatpush2.bf16.xpose.msra.mxu0 0
    %363 = vmatprep.subr.bf16.mxu0 0
    %364 = vmatpush2.bf16.xpose.msra.mxu0 0
    %365 = vmatprep.subr.bf16.mxu0 0
    %366 = vmatpush2.bf16.xpose.msra.mxu0 0
    %367 = vmatprep.subr.bf16.mxu0 0
    %368 = vmatpush2.bf16.xpose.msra.mxu0 0
    %369 = vmatprep.subr.bf16.mxu0 0
    %370 = vmatpush2.bf16.xpose.msra.mxu0 0
    %371 = vmatprep.mubr.bf16.mxu0 0
    %372 = vmatmul.mubr.bf16.gmra.mxu0 %v334
    %v373 = vpop.f32.mrf.mxu0
    %v374 = vadd.f32 0.0, %v373
    %v375 = vpop.f32.mrf.mxu0
    %v376 = vpop.f32.mrf.mxu0
    %v377 = vadd.f32 0.0, %v376
    %v378 = vpop.f32.mrf.mxu0
    %379 = vdwg.mxu0
    %v380 = vpack.c.bf16 %v377, %v374
    %v381 = vld [vmem:[%s5] sm:$0xf]
    %v382 = vpack.c.bf16 %v228, %v228
    %384 = vrot.lane.b32.xlu0 %v257, 120
    %v385 = vpop.permute.xlu0 %384
    %v387 = vsel %vm259, %v385, 0
    %v390 = vsel %vm263, %v382, 0
    %392 = vmatprep.subr.bf16.mxu0 0
    %393 = vmatpush1.bf16.msra.mxu0 0
    %394 = vmatprep.subr.bf16.mxu0 0
    %395 = vmatpush1.bf16.msra.mxu0 0
    %396 = vmatprep.subr.bf16.mxu0 0
    %397 = vmatpush1.bf16.msra.mxu0 0
    %398 = vmatprep.subr.bf16.mxu0 0
    %399 = vmatpush1.bf16.msra.mxu0 0
    %400 = vmatprep.subr.bf16.mxu0 0
    %401 = vmatpush1.bf16.msra.mxu0 0
    %402 = vmatprep.subr.bf16.mxu0 0
    %403 = vmatpush1.bf16.msra.mxu0 0
    %404 = vmatprep.subr.bf16.mxu0 0
    %405 = vmatpush1.bf16.msra.mxu0 0
    %406 = vmatprep.subr.bf16.mxu0 0
    %407 = vmatpush1.bf16.msra.mxu0 %v390
    %408 = vmatprep.subr.bf16.mxu0 0
    %409 = vmatpush2.bf16.msra.mxu0 0
    %410 = vmatprep.subr.bf16.mxu0 0
    %411 = vmatpush2.bf16.msra.mxu0 0
    %412 = vmatprep.subr.bf16.mxu0 0
    %413 = vmatpush2.bf16.msra.mxu0 0
    %414 = vmatprep.subr.bf16.mxu0 0
    %415 = vmatpush2.bf16.msra.mxu0 0
    %416 = vmatprep.subr.bf16.mxu0 0
    %417 = vmatpush2.bf16.msra.mxu0 0
    %418 = vmatprep.subr.bf16.mxu0 0
    %419 = vmatpush2.bf16.msra.mxu0 0
    %420 = vmatprep.subr.bf16.mxu0 0
    %421 = vmatpush2.bf16.msra.mxu0 0
    %422 = vmatprep.subr.bf16.mxu0 0
    %423 = vmatpush2.bf16.msra.mxu0 0
    %424 = vmatprep.mubr.bf16.mxu0 0
    %425 = vmatmul.mubr.bf16.gmra.mxu0 %v387
    %v426 = vpop.f32.mrf.mxu0
    %v427 = vadd.f32 %v255, %v426
    %v428 = vpop.f32.mrf.mxu0
    %v429 = vpop.f32.mrf.mxu0
    %v430 = vadd.f32 %v256, %v429
    %v431 = vpop.f32.mrf.mxu0
    %432 = vdwg.mxu0
    %v433 = vsel %vm308, %v427, -inf
    %434 = vmax.xlane.f32.xlu0 %v433
    %v435 = vpop.xlane.xlu0 %434
    %v436 = vsel %vm308, %v430, -inf
    %437 = vmax.xlane.f32.xlu0 %v436
    %v438 = vpop.xlane.xlu0 %437
    %v439 = vsub.f32 %v427, %v435
    %v440 = vsub.f32 %v430, %v438
    %v441 = vmul.f32 %v439, 1.442695
    %v442 = vpow.pop %v441
    %v443 = vmul.f32 %v440, 1.442695
    %v444 = vpow.pop %v443
    %v445 = vsel %vm308, %v442, 0.0
    %446 = vadd.xlane.f32.xlu0 %v445
    %v447 = vpop.xlane.xlu0 %446
    %v448 = vsel %vm308, %v444, 0.0
    %449 = vadd.xlane.f32.xlu0 %v448
    %v450 = vpop.xlane.xlu0 %449
    %v451 = vrcp.pop %v447
    %v452 = vrcp.pop %v450
    %v453 = vmul.f32 %v442, %v451
    %v454 = vmul.f32 %v444, %v452
    %v455 = vpack.c.bf16 %v454, %v453
    %v456 = vpack.c.bf16 %v244, %v244
    %v458 = vsel %vm308, %v455, 0
    %v461 = vsel %vm308, %v456, 0
    %463 = vmatprep.subr.bf16.mxu0 0
    %464 = vmatpush1.bf16.xpose.msra.mxu0 0
    %465 = vmatprep.subr.bf16.mxu0 0
    %466 = vmatpush1.bf16.xpose.msra.mxu0 0
    %467 = vmatprep.subr.bf16.mxu0 0
    %468 = vmatpush1.bf16.xpose.msra.mxu0 0
    %469 = vmatprep.subr.bf16.mxu0 0
    %470 = vmatpush1.bf16.xpose.msra.mxu0 0
    %471 = vmatprep.subr.bf16.mxu0 0
    %472 = vmatpush1.bf16.xpose.msra.mxu0 0
    %473 = vmatprep.subr.bf16.mxu0 0
    %474 = vmatpush1.bf16.xpose.msra.mxu0 0
    %475 = vmatprep.subr.bf16.mxu0 0
    %476 = vmatpush1.bf16.xpose.msra.mxu0 0
    %477 = vmatprep.subr.bf16.mxu0 0
    %478 = vmatpush1.bf16.xpose.msra.mxu0 %v461
    %479 = vmatprep.subr.bf16.mxu0 0
    %480 = vmatpush2.bf16.xpose.msra.mxu0 0
    %481 = vmatprep.subr.bf16.mxu0 0
    %482 = vmatpush2.bf16.xpose.msra.mxu0 0
    %483 = vmatprep.subr.bf16.mxu0 0
    %484 = vmatpush2.bf16.xpose.msra.mxu0 0
    %485 = vmatprep.subr.bf16.mxu0 0
    %486 = vmatpush2.bf16.xpose.msra.mxu0 0
    %487 = vmatprep.subr.bf16.mxu0 0
    %488 = vmatpush2.bf16.xpose.msra.mxu0 0
    %489 = vmatprep.subr.bf16.mxu0 0
    %490 = vmatpush2.bf16.xpose.msra.mxu0 0
    %491 = vmatprep.subr.bf16.mxu0 0
    %492 = vmatpush2.bf16.xpose.msra.mxu0 0
    %493 = vmatprep.subr.bf16.mxu0 0
    %494 = vmatpush2.bf16.xpose.msra.mxu0 0
    %495 = vmatprep.mubr.bf16.mxu0 0
    %496 = vmatmul.mubr.bf16.gmra.mxu0 %v458
    %v497 = vpop.f32.mrf.mxu0
    %v498 = vadd.f32 0.0, %v497
    %v499 = vpop.f32.mrf.mxu0
    %v500 = vpop.f32.mrf.mxu0
    %v501 = vadd.f32 0.0, %v500
    %v502 = vpop.f32.mrf.mxu0
    %503 = vdwg.mxu0
    %v504 = vpack.c.bf16 %v501, %v498
    %v505 = vld [vmem:[%s5 + $0x4] sm:$0xf]
    %v507 = vsel %vm259, %v504, 0
    %v510 = vsel %vm263, %v505, 0
    %512 = vmatprep.subr.bf16.mxu0 0
    %513 = vmatpush1.bf16.msra.mxu0 0
    %514 = vmatprep.subr.bf16.mxu0 0
    %515 = vmatpush1.bf16.msra.mxu0 0
    %516 = vmatprep.subr.bf16.mxu0 0
    %517 = vmatpush1.bf16.msra.mxu0 0
    %518 = vmatprep.subr.bf16.mxu0 0
    %519 = vmatpush1.bf16.msra.mxu0 0
    %520 = vmatprep.subr.bf16.mxu0 0
    %521 = vmatpush1.bf16.msra.mxu0 0
    %522 = vmatprep.subr.bf16.mxu0 0
    %523 = vmatpush1.bf16.msra.mxu0 0
    %524 = vmatprep.subr.bf16.mxu0 0
    %525 = vmatpush1.bf16.msra.mxu0 0
    %526 = vmatprep.subr.bf16.mxu0 0
    %527 = vmatpush1.bf16.msra.mxu0 %v510
    %528 = vmatprep.subr.bf16.mxu0 0
    %529 = vmatpush2.bf16.msra.mxu0 0
    %530 = vmatprep.subr.bf16.mxu0 0
    %531 = vmatpush2.bf16.msra.mxu0 0
    %532 = vmatprep.subr.bf16.mxu0 0
    %533 = vmatpush2.bf16.msra.mxu0 0
    %534 = vmatprep.subr.bf16.mxu0 0
    %535 = vmatpush2.bf16.msra.mxu0 0
    %536 = vmatprep.subr.bf16.mxu0 0
    %537 = vmatpush2.bf16.msra.mxu0 0
    %538 = vmatprep.subr.bf16.mxu0 0
    %539 = vmatpush2.bf16.msra.mxu0 0
    %540 = vmatprep.subr.bf16.mxu0 0
    %541 = vmatpush2.bf16.msra.mxu0 0
    %542 = vmatprep.subr.bf16.mxu0 0
    %543 = vmatpush2.bf16.msra.mxu0 0
    %544 = vmatprep.mubr.bf16.mxu0 0
    %545 = vmatmul.mubr.bf16.gmra.mxu0 %v507
    %v546 = vpop.f32.mrf.mxu0
    %v547 = vadd.f32 0.0, %v546
    %v548 = vpop.f32.mrf.mxu0
    %v549 = vpop.f32.mrf.mxu0
    %v550 = vadd.f32 0.0, %v549
    %v551 = vpop.f32.mrf.mxu0
    %552 = vdwg.mxu0
    %v554 = vsel %vm259, %v380, 0
    %v557 = vsel %vm263, %v381, 0
    %559 = vmatprep.subr.bf16.mxu0 0
    %560 = vmatpush1.bf16.msra.mxu0 0
    %561 = vmatprep.subr.bf16.mxu0 0
    %562 = vmatpush1.bf16.msra.mxu0 0
    %563 = vmatprep.subr.bf16.mxu0 0
    %564 = vmatpush1.bf16.msra.mxu0 0
    %565 = vmatprep.subr.bf16.mxu0 0
    %566 = vmatpush1.bf16.msra.mxu0 0
    %567 = vmatprep.subr.bf16.mxu0 0
    %568 = vmatpush1.bf16.msra.mxu0 0
    %569 = vmatprep.subr.bf16.mxu0 0
    %570 = vmatpush1.bf16.msra.mxu0 0
    %571 = vmatprep.subr.bf16.mxu0 0
    %572 = vmatpush1.bf16.msra.mxu0 0
    %573 = vmatprep.subr.bf16.mxu0 0
    %574 = vmatpush1.bf16.msra.mxu0 %v557
    %575 = vmatprep.subr.bf16.mxu0 0
    %576 = vmatpush2.bf16.msra.mxu0 0
    %577 = vmatprep.subr.bf16.mxu0 0
    %578 = vmatpush2.bf16.msra.mxu0 0
    %579 = vmatprep.subr.bf16.mxu0 0
    %580 = vmatpush2.bf16.msra.mxu0 0
    %581 = vmatprep.subr.bf16.mxu0 0
    %582 = vmatpush2.bf16.msra.mxu0 0
    %583 = vmatprep.subr.bf16.mxu0 0
    %584 = vmatpush2.bf16.msra.mxu0 0
    %585 = vmatprep.subr.bf16.mxu0 0
    %586 = vmatpush2.bf16.msra.mxu0 0
    %587 = vmatprep.subr.bf16.mxu0 0
    %588 = vmatpush2.bf16.msra.mxu0 0
    %589 = vmatprep.subr.bf16.mxu0 0
    %590 = vmatpush2.bf16.msra.mxu0 0
    %591 = vmatprep.mubr.bf16.mxu0 0
    %592 = vmatmul.mubr.bf16.gmra.mxu0 %v554
    %v593 = vpop.f32.mrf.mxu0
    %v594 = vadd.f32 %v547, %v593
    %v595 = vpop.f32.mrf.mxu0
    %v596 = vpop.f32.mrf.mxu0
    %v597 = vadd.f32 %v550, %v596
    %v598 = vpop.f32.mrf.mxu0
    %599 = vdwg.mxu0
    %v600 = vpack.c.bf16 %v233, %v233
    %601 = vrot.lane.b32.xlu0 %v257, 112
    %v602 = vpop.permute.xlu0 %601
    %v604 = vsel %vm259, %v602, 0
    %v607 = vsel %vm263, %v600, 0
    %609 = vmatprep.subr.bf16.mxu0 0
    %610 = vmatpush1.bf16.msra.mxu0 0
    %611 = vmatprep.subr.bf16.mxu0 0
    %612 = vmatpush1.bf16.msra.mxu0 0
    %613 = vmatprep.subr.bf16.mxu0 0
    %614 = vmatpush1.bf16.msra.mxu0 0
    %615 = vmatprep.subr.bf16.mxu0 0
    %616 = vmatpush1.bf16.msra.mxu0 0
    %617 = vmatprep.subr.bf16.mxu0 0
    %618 = vmatpush1.bf16.msra.mxu0 0
    %619 = vmatprep.subr.bf16.mxu0 0
    %620 = vmatpush1.bf16.msra.mxu0 0
    %621 = vmatprep.subr.bf16.mxu0 0
    %622 = vmatpush1.bf16.msra.mxu0 0
    %623 = vmatprep.subr.bf16.mxu0 0
    %624 = vmatpush1.bf16.msra.mxu0 %v607
    %625 = vmatprep.subr.bf16.mxu0 0
    %626 = vmatpush2.bf16.msra.mxu0 0
    %627 = vmatprep.subr.bf16.mxu0 0
    %628 = vmatpush2.bf16.msra.mxu0 0
    %629 = vmatprep.subr.bf16.mxu0 0
    %630 = vmatpush2.bf16.msra.mxu0 0
    %631 = vmatprep.subr.bf16.mxu0 0
    %632 = vmatpush2.bf16.msra.mxu0 0
    %633 = vmatprep.subr.bf16.mxu0 0
    %634 = vmatpush2.bf16.msra.mxu0 0
    %635 = vmatprep.subr.bf16.mxu0 0
    %636 = vmatpush2.bf16.msra.mxu0 0
    %637 = vmatprep.subr.bf16.mxu0 0
    %638 = vmatpush2.bf16.msra.mxu0 0
    %639 = vmatprep.subr.bf16.mxu0 0
    %640 = vmatpush2.bf16.msra.mxu0 0
    %641 = vmatprep.mubr.bf16.mxu0 0
    %642 = vmatmul.mubr.bf16.gmra.mxu0 %v604
    %v643 = vpop.f32.mrf.mxu0
    %v644 = vadd.f32 %v255, %v643
    %v645 = vpop.f32.mrf.mxu0
    %v646 = vpop.f32.mrf.mxu0
    %v647 = vadd.f32 %v256, %v646
    %v648 = vpop.f32.mrf.mxu0
    %649 = vdwg.mxu0
    %v650 = vsel %vm308, %v644, -inf
    %651 = vmax.xlane.f32.xlu0 %v650
    %v652 = vpop.xlane.xlu0 %651
    %v653 = vsel %vm308, %v647, -inf
    %654 = vmax.xlane.f32.xlu0 %v653
    %v655 = vpop.xlane.xlu0 %654
    %v656 = vsub.f32 %v644, %v652
    %v657 = vsub.f32 %v647, %v655
    %v658 = vmul.f32 %v656, 1.442695
    %v659 = vpow.pop %v658
    %v660 = vmul.f32 %v657, 1.442695
    %v661 = vpow.pop %v660
    %v662 = vsel %vm308, %v659, 0.0
    %663 = vadd.xlane.f32.xlu0 %v662
    %v664 = vpop.xlane.xlu0 %663
    %v665 = vsel %vm308, %v661, 0.0
    %666 = vadd.xlane.f32.xlu0 %v665
    %v667 = vpop.xlane.xlu0 %666
    %v668 = vrcp.pop %v664
    %v669 = vrcp.pop %v667
    %v670 = vmul.f32 %v659, %v668
    %v671 = vmul.f32 %v661, %v669
    %v672 = vpack.c.bf16 %v671, %v670
    %v673 = vpack.c.bf16 %v249, %v249
    %v675 = vsel %vm308, %v672, 0
    %v678 = vsel %vm308, %v673, 0
    %680 = vmatprep.subr.bf16.mxu0 0
    %681 = vmatpush1.bf16.xpose.msra.mxu0 0
    %682 = vmatprep.subr.bf16.mxu0 0
    %683 = vmatpush1.bf16.xpose.msra.mxu0 0
    %684 = vmatprep.subr.bf16.mxu0 0
    %685 = vmatpush1.bf16.xpose.msra.mxu0 0
    %686 = vmatprep.subr.bf16.mxu0 0
    %687 = vmatpush1.bf16.xpose.msra.mxu0 0
    %688 = vmatprep.subr.bf16.mxu0 0
    %689 = vmatpush1.bf16.xpose.msra.mxu0 0
    %690 = vmatprep.subr.bf16.mxu0 0
    %691 = vmatpush1.bf16.xpose.msra.mxu0 0
    %692 = vmatprep.subr.bf16.mxu0 0
    %693 = vmatpush1.bf16.xpose.msra.mxu0 0
    %694 = vmatprep.subr.bf16.mxu0 0
    %695 = vmatpush1.bf16.xpose.msra.mxu0 %v678
    %696 = vmatprep.subr.bf16.mxu0 0
    %697 = vmatpush2.bf16.xpose.msra.mxu0 0
    %698 = vmatprep.subr.bf16.mxu0 0
    %699 = vmatpush2.bf16.xpose.msra.mxu0 0
    %700 = vmatprep.subr.bf16.mxu0 0
    %701 = vmatpush2.bf16.xpose.msra.mxu0 0
    %702 = vmatprep.subr.bf16.mxu0 0
    %703 = vmatpush2.bf16.xpose.msra.mxu0 0
    %704 = vmatprep.subr.bf16.mxu0 0
    %705 = vmatpush2.bf16.xpose.msra.mxu0 0
    %706 = vmatprep.subr.bf16.mxu0 0
    %707 = vmatpush2.bf16.xpose.msra.mxu0 0
    %708 = vmatprep.subr.bf16.mxu0 0
    %709 = vmatpush2.bf16.xpose.msra.mxu0 0
    %710 = vmatprep.subr.bf16.mxu0 0
    %711 = vmatpush2.bf16.xpose.msra.mxu0 0
    %712 = vmatprep.mubr.bf16.mxu0 0
    %713 = vmatmul.mubr.bf16.gmra.mxu0 %v675
    %v714 = vpop.f32.mrf.mxu0
    %v715 = vadd.f32 0.0, %v714
    %v716 = vpop.f32.mrf.mxu0
    %v717 = vpop.f32.mrf.mxu0
    %v718 = vadd.f32 0.0, %v717
    %v719 = vpop.f32.mrf.mxu0
    %720 = vdwg.mxu0
    %v721 = vpack.c.bf16 %v718, %v715
    %v722 = vld [vmem:[%s5 + $0x8] sm:$0xf]
    %v724 = vsel %vm259, %v721, 0
    %v727 = vsel %vm263, %v722, 0
    %729 = vmatprep.subr.bf16.mxu0 0
    %730 = vmatpush1.bf16.msra.mxu0 0
    %731 = vmatprep.subr.bf16.mxu0 0
    %732 = vmatpush1.bf16.msra.mxu0 0
    %733 = vmatprep.subr.bf16.mxu0 0
    %734 = vmatpush1.bf16.msra.mxu0 0
    %735 = vmatprep.subr.bf16.mxu0 0
    %736 = vmatpush1.bf16.msra.mxu0 0
    %737 = vmatprep.subr.bf16.mxu0 0
    %738 = vmatpush1.bf16.msra.mxu0 0
    %739 = vmatprep.subr.bf16.mxu0 0
    %740 = vmatpush1.bf16.msra.mxu0 0
    %741 = vmatprep.subr.bf16.mxu0 0
    %742 = vmatpush1.bf16.msra.mxu0 0
    %743 = vmatprep.subr.bf16.mxu0 0
    %744 = vmatpush1.bf16.msra.mxu0 %v727
    %745 = vmatprep.subr.bf16.mxu0 0
    %746 = vmatpush2.bf16.msra.mxu0 0
    %747 = vmatprep.subr.bf16.mxu0 0
    %748 = vmatpush2.bf16.msra.mxu0 0
    %749 = vmatprep.subr.bf16.mxu0 0
    %750 = vmatpush2.bf16.msra.mxu0 0
    %751 = vmatprep.subr.bf16.mxu0 0
    %752 = vmatpush2.bf16.msra.mxu0 0
    %753 = vmatprep.subr.bf16.mxu0 0
    %754 = vmatpush2.bf16.msra.mxu0 0
    %755 = vmatprep.subr.bf16.mxu0 0
    %756 = vmatpush2.bf16.msra.mxu0 0
    %757 = vmatprep.subr.bf16.mxu0 0
    %758 = vmatpush2.bf16.msra.mxu0 0
    %759 = vmatprep.subr.bf16.mxu0 0
    %760 = vmatpush2.bf16.msra.mxu0 0
    %761 = vmatprep.mubr.bf16.mxu0 0
    %762 = vmatmul.mubr.bf16.gmra.mxu0 %v724
    %v763 = vpop.f32.mrf.mxu0
    %v764 = vadd.f32 0.0, %v763
    %v765 = vpop.f32.mrf.mxu0
    %v766 = vpop.f32.mrf.mxu0
    %v767 = vadd.f32 0.0, %v766
    %v768 = vpop.f32.mrf.mxu0
    %769 = vdwg.mxu0
    %v770 = vadd.f32 %v594, %v764
    %v771 = vadd.f32 %v597, %v767
    %v772 = vpack.c.bf16 %v236, %v236
    %773 = vrot.lane.b32.xlu0 %v257, 104
    %v774 = vpop.permute.xlu0 %773
    %v776 = vsel %vm259, %v774, 0
    %v779 = vsel %vm263, %v772, 0
    %781 = vmatprep.subr.bf16.mxu0 0
    %782 = vmatpush1.bf16.msra.mxu0 0
    %783 = vmatprep.subr.bf16.mxu0 0
    %784 = vmatpush1.bf16.msra.mxu0 0
    %785 = vmatprep.subr.bf16.mxu0 0
    %786 = vmatpush1.bf16.msra.mxu0 0
    %787 = vmatprep.subr.bf16.mxu0 0
    %788 = vmatpush1.bf16.msra.mxu0 0
    %789 = vmatprep.subr.bf16.mxu0 0
    %790 = vmatpush1.bf16.msra.mxu0 0
    %791 = vmatprep.subr.bf16.mxu0 0
    %792 = vmatpush1.bf16.msra.mxu0 0
    %793 = vmatprep.subr.bf16.mxu0 0
    %794 = vmatpush1.bf16.msra.mxu0 0
    %795 = vmatprep.subr.bf16.mxu0 0
    %796 = vmatpush1.bf16.msra.mxu0 %v779
    %797 = vmatprep.subr.bf16.mxu0 0
    %798 = vmatpush2.bf16.msra.mxu0 0
    %799 = vmatprep.subr.bf16.mxu0 0
    %800 = vmatpush2.bf16.msra.mxu0 0
    %801 = vmatprep.subr.bf16.mxu0 0
    %802 = vmatpush2.bf16.msra.mxu0 0
    %803 = vmatprep.subr.bf16.mxu0 0
    %804 = vmatpush2.bf16.msra.mxu0 0
    %805 = vmatprep.subr.bf16.mxu0 0
    %806 = vmatpush2.bf16.msra.mxu0 0
    %807 = vmatprep.subr.bf16.mxu0 0
    %808 = vmatpush2.bf16.msra.mxu0 0
    %809 = vmatprep.subr.bf16.mxu0 0
    %810 = vmatpush2.bf16.msra.mxu0 0
    %811 = vmatprep.subr.bf16.mxu0 0
    %812 = vmatpush2.bf16.msra.mxu0 0
    %813 = vmatprep.mubr.bf16.mxu0 0
    %814 = vmatmul.mubr.bf16.gmra.mxu0 %v776
    %v815 = vpop.f32.mrf.mxu0
    %v816 = vadd.f32 %v255, %v815
    %v817 = vpop.f32.mrf.mxu0
    %v818 = vpop.f32.mrf.mxu0
    %v819 = vadd.f32 %v256, %v818
    %v820 = vpop.f32.mrf.mxu0
    %821 = vdwg.mxu0
    %v822 = vsel %vm308, %v816, -inf
    %823 = vmax.xlane.f32.xlu0 %v822
    %v824 = vpop.xlane.xlu0 %823
    %v825 = vsel %vm308, %v819, -inf
    %826 = vmax.xlane.f32.xlu0 %v825
    %v827 = vpop.xlane.xlu0 %826
    %v828 = vsub.f32 %v816, %v824
    %v829 = vsub.f32 %v819, %v827
    %v830 = vmul.f32 %v828, 1.442695
    %v831 = vpow.pop %v830
    %v832 = vmul.f32 %v829, 1.442695
    %v833 = vpow.pop %v832
    %v834 = vsel %vm308, %v831, 0.0
    %835 = vadd.xlane.f32.xlu0 %v834
    %v836 = vpop.xlane.xlu0 %835
    %v837 = vsel %vm308, %v833, 0.0
    %838 = vadd.xlane.f32.xlu0 %v837
    %v839 = vpop.xlane.xlu0 %838
    %v840 = vrcp.pop %v836
    %v841 = vrcp.pop %v839
    %v842 = vmul.f32 %v831, %v840
    %v843 = vmul.f32 %v833, %v841
    %v844 = vpack.c.bf16 %v843, %v842
    %v845 = vpack.c.bf16 %v252, %v252
    %v847 = vsel %vm308, %v844, 0
    %v850 = vsel %vm308, %v845, 0
    %852 = vmatprep.subr.bf16.mxu0 0
    %853 = vmatpush1.bf16.xpose.msra.mxu0 0
    %854 = vmatprep.subr.bf16.mxu0 0
    %855 = vmatpush1.bf16.xpose.msra.mxu0 0
    %856 = vmatprep.subr.bf16.mxu0 0
    %857 = vmatpush1.bf16.xpose.msra.mxu0 0
    %858 = vmatprep.subr.bf16.mxu0 0
    %859 = vmatpush1.bf16.xpose.msra.mxu0 0
    %860 = vmatprep.subr.bf16.mxu0 0
    %861 = vmatpush1.bf16.xpose.msra.mxu0 0
    %862 = vmatprep.subr.bf16.mxu0 0
    %863 = vmatpush1.bf16.xpose.msra.mxu0 0
    %864 = vmatprep.subr.bf16.mxu0 0
    %865 = vmatpush1.bf16.xpose.msra.mxu0 0
    %866 = vmatprep.subr.bf16.mxu0 0
    %867 = vmatpush1.bf16.xpose.msra.mxu0 %v850
    %868 = vmatprep.subr.bf16.mxu0 0
    %869 = vmatpush2.bf16.xpose.msra.mxu0 0
    %870 = vmatprep.subr.bf16.mxu0 0
    %871 = vmatpush2.bf16.xpose.msra.mxu0 0
    %872 = vmatprep.subr.bf16.mxu0 0
    %873 = vmatpush2.bf16.xpose.msra.mxu0 0
    %874 = vmatprep.subr.bf16.mxu0 0
    %875 = vmatpush2.bf16.xpose.msra.mxu0 0
    %876 = vmatprep.subr.bf16.mxu0 0
    %877 = vmatpush2.bf16.xpose.msra.mxu0 0
    %878 = vmatprep.subr.bf16.mxu0 0
    %879 = vmatpush2.bf16.xpose.msra.mxu0 0
    %880 = vmatprep.subr.bf16.mxu0 0
    %881 = vmatpush2.bf16.xpose.msra.mxu0 0
    %882 = vmatprep.subr.bf16.mxu0 0
    %883 = vmatpush2.bf16.xpose.msra.mxu0 0
    %884 = vmatprep.mubr.bf16.mxu0 0
    %885 = vmatmul.mubr.bf16.gmra.mxu0 %v847
    %v886 = vpop.f32.mrf.mxu0
    %v887 = vadd.f32 0.0, %v886
    %v888 = vpop.f32.mrf.mxu0
    %v889 = vpop.f32.mrf.mxu0
    %v890 = vadd.f32 0.0, %v889
    %v891 = vpop.f32.mrf.mxu0
    %892 = vdwg.mxu0
    %v893 = vpack.c.bf16 %v890, %v887
    %v894 = vld [vmem:[%s5 + $0xc] sm:$0xf]
    %v896 = vsel %vm259, %v893, 0
    %v899 = vsel %vm263, %v894, 0
    %901 = vmatprep.subr.bf16.mxu0 0
    %902 = vmatpush1.bf16.msra.mxu0 0
    %903 = vmatprep.subr.bf16.mxu0 0
    %904 = vmatpush1.bf16.msra.mxu0 0
    %905 = vmatprep.subr.bf16.mxu0 0
    %906 = vmatpush1.bf16.msra.mxu0 0
    %907 = vmatprep.subr.bf16.mxu0 0
    %908 = vmatpush1.bf16.msra.mxu0 0
    %909 = vmatprep.subr.bf16.mxu0 0
    %910 = vmatpush1.bf16.msra.mxu0 0
    %911 = vmatprep.subr.bf16.mxu0 0
    %912 = vmatpush1.bf16.msra.mxu0 0
    %913 = vmatprep.subr.bf16.mxu0 0
    %914 = vmatpush1.bf16.msra.mxu0 0
    %915 = vmatprep.subr.bf16.mxu0 0
    %916 = vmatpush1.bf16.msra.mxu0 %v899
    %917 = vmatprep.subr.bf16.mxu0 0
    %918 = vmatpush2.bf16.msra.mxu0 0
    %919 = vmatprep.subr.bf16.mxu0 0
    %920 = vmatpush2.bf16.msra.mxu0 0
    %921 = vmatprep.subr.bf16.mxu0 0
    %922 = vmatpush2.bf16.msra.mxu0 0
    %923 = vmatprep.subr.bf16.mxu0 0
    %924 = vmatpush2.bf16.msra.mxu0 0
    %925 = vmatprep.subr.bf16.mxu0 0
    %926 = vmatpush2.bf16.msra.mxu0 0
    %927 = vmatprep.subr.bf16.mxu0 0
    %928 = vmatpush2.bf16.msra.mxu0 0
    %929 = vmatprep.subr.bf16.mxu0 0
    %930 = vmatpush2.bf16.msra.mxu0 0
    %931 = vmatprep.subr.bf16.mxu0 0
    %932 = vmatpush2.bf16.msra.mxu0 0
    %933 = vmatprep.mubr.bf16.mxu0 0
    %934 = vmatmul.mubr.bf16.gmra.mxu0 %v896
    %v935 = vpop.f32.mrf.mxu0
    %v936 = vadd.f32 0.0, %v935
    %v937 = vpop.f32.mrf.mxu0
    %v938 = vpop.f32.mrf.mxu0
    %v939 = vadd.f32 0.0, %v938
    %v940 = vpop.f32.mrf.mxu0
    %941 = vdwg.mxu0
    %v942 = vadd.f32 %v770, %v936
    %v943 = vadd.f32 %v771, %v939
    %v944 = vld [vmem:[%s6] sm:$0x1]
    %v946 = vlaneseq
    %v947 = vshrl.u32 %v946, 7
    %v948 = vsub.s32 0, %v947
    %v949 = vrot.slane %v944, %v948
    %v951 = vadd.f32 %v942, %v949
    %v952 = vadd.f32 %v943, %v949
    %953 = vst.msk [vmem:[#allocation2] sm:$0xff] %vm57, %v951
    %954 = vst.msk [vmem:[#allocation2 + $0x8] sm:$0xff] %vm57, %v952
    // Predicated region
    $region34: #{tpu_custom_call.1} parent=1 // pred_check
      _
    $region35: #{tpu_custom_call.1} parent=1 // pred_check_branch
      %956 = sbr.rel (0) target = $region37
    $region36: #{tpu_custom_call.1} parent=1 // pred_region
      %s958 = ssub.s32 256, 256
      %959 = vsyncadd [#allocation3], %s958
      %s960 = sshll.u32 [#allocation2], 4
      %s961 = int_to_ptr.vmem [resolvable:$true] %s960
      %966 = dma.vmem_to_hbm [thread:$0]  %s961, 256, %s8, [#allocation3], 128, 128, 8
    $region37: #{tpu_custom_call.1} parent=1 // pred_fallthru
      _
    // Predicated region
    $region38: #{tpu_custom_call.1} parent=1 // pred_check
      _
    $region39: #{tpu_custom_call.1} parent=1 // pred_check_branch
      %968 = sbr.rel (0) target = $region41
    $region40: #{tpu_custom_call.1} parent=1 // pred_region
      %969 = dma.done [#allocation3], 256
    $region41: #{tpu_custom_call.1} parent=1 // pred_fallthru
      _
    %970 = vsyncpa [#allocation3], 1

</llo_original>
